<compile_context>
chip_gen: v5e
topology: v5e:2x2
jax: 0.10.0
libtpu: 0.0.40
codegen_flags: <defaults>
</compile_context>

<pallas_src>
import functools

import jax
import jax.numpy as jnp
from jax import lax
from jax.experimental import pallas as pl
from jax.experimental.pallas import tpu as pltpu  # noqa: F401  (TPU backend)


def _round_up(n, m):
    return ((n + m - 1) // m) * m


def nao_brain_kernel(x_ref, p_ref, y_ref, *, in_size, hidden, n_mu):
    """Two inputs only: x and the packed parameter slab.

    Slab layout (rows, static):
      [0 : in_size]                     W1      [in_size, hidden]
      [in_size]                         b1      [1, hidden]
      [in_size+1 : in_size+1+hidden]    Whead   [hidden, n_mu+1]
      [in_size+1+hidden]                bhead   [1, n_mu+1]
    """
    n_head = n_mu + 1
    x = x_ref[...]                                   # [B, in]
    p = p_ref[...]                                   # [rows_pad, cols_pad]

    w1 = p[0:in_size, 0:hidden]                      # [in, hidden]
    b1 = p[in_size:in_size + 1, 0:hidden]            # [1, hidden]
    r0 = in_size + 1
    whead = p[r0:r0 + hidden, 0:n_head]              # [hidden, n_head]
    bhead = p[r0 + hidden:r0 + hidden + 1, 0:n_head]  # [1, n_head]

    # ---- fc1 + ReLU on the VPU (K tiny; MXU would be pure latency). ----
    h = b1                                           # [1, hidden] -> broadcasts
    for k in range(in_size):                         # static, tiny unroll
        h = h + x[:, k:k + 1] * w1[k:k + 1, :]       # [B, hidden]
    h = jnp.maximum(h, 0.0)

    # ---- fused head: [mu | log_sigma] ----
    if hidden >= 64:
        # Large hidden: worth pushing through the MXU.
        y = jnp.dot(h, whead, preferred_element_type=jnp.float32) + bhead
    else:
        # Small hidden: unrolled VPU broadcast-FMAs, no MXU pipeline latency.
        y = jnp.broadcast_to(bhead, (x.shape[0], n_head))
        for k in range(hidden):                      # static unroll (10)
            y = y + h[:, k:k + 1] * whead[k:k + 1, :]

    # exp only on the sigma column, with the discarded branch zeroed first so
    # no inf is ever materialized (safe for future differentiation).
    col = lax.broadcasted_iota(jnp.int32, y.shape, 1)
    is_sigma = col >= n_mu
    sig = jnp.exp(jnp.where(is_sigma, y, 0.0))
    y_ref[...] = jnp.where(is_sigma, sig, y).astype(y_ref.dtype)


def prepare_params(params):
    """One-time parameter preparation: fuse heads and pack everything into a
    single padded f32 slab so the kernel needs exactly one parameter DMA."""
    w1, b1, wmu, bmu, wsig, bsig = params
    in_size, hidden = w1.shape
    out = wmu.shape[1]
    n_head = out + 1

    whead = jnp.concatenate([wmu, wsig], axis=1)     # [hidden, out+1]
    bhead = jnp.concatenate([bmu, bsig], axis=1)     # [1, out+1]

    rows = in_size + 1 + hidden + 1
    rows_pad = _round_up(rows, 8)
    cols_pad = _round_up(max(hidden, n_head), 128)

    slab = jnp.zeros((rows_pad, cols_pad), jnp.float32)
    slab = slab.at[0:in_size, 0:hidden].set(w1)
    slab = slab.at[in_size:in_size + 1, 0:hidden].set(b1)
    r0 = in_size + 1
    slab = slab.at[r0:r0 + hidden, 0:n_head].set(whead)
    slab = slab.at[r0 + hidden:r0 + hidden + 1, 0:n_head].set(bhead)

    dims = (in_size, hidden, out)
    return slab, dims


def nao_brain_forward(x, packed_params, dims):
    """Runs the NaoBrain forward pass. Returns (mu, sigma) of the Normal."""
    in_size, hidden, out = dims
    B = x.shape[0]
    n_head = out + 1

    full = lambda shape: pl.BlockSpec(shape, lambda: (0,) * len(shape))

    flops = 2 * B * in_size * hidden + 2 * B * hidden * n_head
    bytes_accessed = 4 * (x.size + packed_params.size + B * n_head)

    y = pl.pallas_call(
        functools.partial(nao_brain_kernel,
                          in_size=in_size, hidden=hidden, n_mu=out),
        out_shape=jax.ShapeDtypeStruct((B, n_head), jnp.float32),
        in_specs=[full(x.shape), full(packed_params.shape)],
        out_specs=full((B, n_head)),
        cost_estimate=pl.CostEstimate(
            flops=int(flops),
            transcendentals=int(B),                  # only the sigma column
            bytes_accessed=int(bytes_accessed),
        ),
    )(x, packed_params)

    mu = y[:, :out]                                  # [B, out]
    sigma = y[:, out:]                               # [B, 1]
    # Normal(mu, sigma) broadcasts sigma [B,1] against mu [B,out].
    return mu, jnp.broadcast_to(sigma, mu.shape)


def init_params(key, input_size=2, output_size=2, hidden_size=10):
    """Deterministic init mimicking nn.Linear's U(-1/sqrt(fan_in), 1/sqrt(fan_in)).
    Weights are stored transposed: [in_features, out_features]."""
    ks = jax.random.split(key, 6)

    def uniform(k, shape, fan_in):
        bound = 1.0 / jnp.sqrt(float(fan_in))
        return jax.random.uniform(k, shape, jnp.float32, -bound, bound)

    w1 = uniform(ks[0], (input_size, hidden_size), input_size)
    b1 = uniform(ks[1], (1, hidden_size), input_size)
    wmu = uniform(ks[2], (hidden_size, output_size), hidden_size)
    bmu = uniform(ks[3], (1, output_size), hidden_size)
    wsig = uniform(ks[4], (hidden_size, 1), hidden_size)
    bsig = uniform(ks[5], (1, 1), hidden_size)
    return (w1, b1, wmu, bmu, wsig, bsig)


def reference_forward(x, params):
    """Plain-JAX reference for correctness checking."""
    w1, b1, wmu, bmu, wsig, bsig = params
    h = jnp.maximum(x @ w1 + b1, 0.0)
    mu = h @ wmu + bmu
    sigma = jnp.exp(h @ wsig + bsig)
    return mu, jnp.broadcast_to(sigma, mu.shape)


if __name__ == "__main__":
    key = jax.random.PRNGKey(0)
    k_params, k_x = jax.random.split(key)

    input_size, output_size, hidden_size = 2, 2, 10
    batch = 8

    params = init_params(k_params, input_size, output_size, hidden_size)
    x = jax.random.normal(k_x, (batch, input_size), jnp.float32)

    # One-time parameter packing (hoisted out of the per-call forward path).
    packed, dims = prepare_params(params)
    packed = jax.block_until_ready(packed)

    mu, sigma = nao_brain_forward(x, packed, dims)
    mu, sigma = jax.block_until_ready((mu, sigma))

    mu_ref, sigma_ref = reference_forward(x, params)
    assert jnp.allclose(mu, mu_ref, atol=1e-5, rtol=1e-5)
    assert jnp.allclose(sigma, sigma_ref, atol=1e-5, rtol=1e-5)
    assert jnp.all(sigma > 0.0)

    # TODO(synk): torch.distributions.Normal object itself (sampling/log_prob)
    # is not a kernel op; we return its (mu, sigma) parameters.
    print("KERNEL_OK")
</pallas_src>

<mosaic_0001>
module attributes {stable_mosaic.version = 11 : i64} {
  func.func @nao_brain_kernel(%arg0: memref<8x2xf32, #tpu.memory_space<vmem>>, %arg1: memref<16x128xf32, #tpu.memory_space<vmem>>, %arg2: memref<8x3xf32, #tpu.memory_space<vmem>>) attributes {dimension_semantics = [], scalar_prefetch = 0 : i64, scratch_operands = 0 : i64, tpu.core_type = #tpu.core_type<tc>} {
    %c0 = arith.constant 0 : index
    %c0_0 = arith.constant 0 : index
    %0 = vector.load %arg0[%c0, %c0_0] : memref<8x2xf32, #tpu.memory_space<vmem>>, vector<8x2xf32>
    %c0_1 = arith.constant 0 : index
    %c0_2 = arith.constant 0 : index
    %1 = vector.load %arg1[%c0_1, %c0_2] : memref<16x128xf32, #tpu.memory_space<vmem>>, vector<16x128xf32>
    %2 = vector.extract_strided_slice %1 {offsets = [0, 0], sizes = [2, 10], strides = [1, 1]} : vector<16x128xf32> to vector<2x10xf32>
    %3 = vector.extract_strided_slice %1 {offsets = [2, 0], sizes = [1, 10], strides = [1, 1]} : vector<16x128xf32> to vector<1x10xf32>
    %4 = vector.extract_strided_slice %1 {offsets = [3, 0], sizes = [10, 3], strides = [1, 1]} : vector<16x128xf32> to vector<10x3xf32>
    %5 = vector.extract_strided_slice %1 {offsets = [13, 0], sizes = [1, 3], strides = [1, 1]} : vector<16x128xf32> to vector<1x3xf32>
    %6 = vector.extract_strided_slice %0 {offsets = [0, 0], sizes = [8, 1], strides = [1, 1]} : vector<8x2xf32> to vector<8x1xf32>
    %7 = vector.extract_strided_slice %2 {offsets = [0, 0], sizes = [1, 10], strides = [1, 1]} : vector<2x10xf32> to vector<1x10xf32>
    %8 = vector.broadcast %6 : vector<8x1xf32> to vector<8x10xf32>
    %9 = vector.broadcast %7 : vector<1x10xf32> to vector<8x10xf32>
    %10 = arith.mulf %8, %9 : vector<8x10xf32>
    %11 = vector.broadcast %3 : vector<1x10xf32> to vector<8x10xf32>
    %12 = arith.addf %11, %10 : vector<8x10xf32>
    %13 = vector.extract_strided_slice %0 {offsets = [0, 1], sizes = [8, 1], strides = [1, 1]} : vector<8x2xf32> to vector<8x1xf32>
    %14 = vector.extract_strided_slice %2 {offsets = [1, 0], sizes = [1, 10], strides = [1, 1]} : vector<2x10xf32> to vector<1x10xf32>
    %15 = vector.broadcast %13 : vector<8x1xf32> to vector<8x10xf32>
    %16 = vector.broadcast %14 : vector<1x10xf32> to vector<8x10xf32>
    %17 = arith.mulf %15, %16 : vector<8x10xf32>
    %18 = arith.addf %12, %17 : vector<8x10xf32>
    %cst = arith.constant 0.000000e+00 : f32
    %19 = vector.broadcast %cst : f32 to vector<8x10xf32>
    %20 = arith.maximumf %18, %19 : vector<8x10xf32>
    %21 = vector.shape_cast %5 : vector<1x3xf32> to vector<1x3xf32>
    %22 = vector.broadcast %21 : vector<1x3xf32> to vector<8x3xf32>
    %23 = vector.extract_strided_slice %20 {offsets = [0, 0], sizes = [8, 1], strides = [1, 1]} : vector<8x10xf32> to vector<8x1xf32>
    %24 = vector.extract_strided_slice %4 {offsets = [0, 0], sizes = [1, 3], strides = [1, 1]} : vector<10x3xf32> to vector<1x3xf32>
    %25 = vector.broadcast %23 : vector<8x1xf32> to vector<8x3xf32>
    %26 = vector.broadcast %24 : vector<1x3xf32> to vector<8x3xf32>
    %27 = arith.mulf %25, %26 : vector<8x3xf32>
    %28 = arith.addf %22, %27 : vector<8x3xf32>
    %29 = vector.extract_strided_slice %20 {offsets = [0, 1], sizes = [8, 1], strides = [1, 1]} : vector<8x10xf32> to vector<8x1xf32>
    %30 = vector.extract_strided_slice %4 {offsets = [1, 0], sizes = [1, 3], strides = [1, 1]} : vector<10x3xf32> to vector<1x3xf32>
    %31 = vector.broadcast %29 : vector<8x1xf32> to vector<8x3xf32>
    %32 = vector.broadcast %30 : vector<1x3xf32> to vector<8x3xf32>
    %33 = arith.mulf %31, %32 : vector<8x3xf32>
    %34 = arith.addf %28, %33 : vector<8x3xf32>
    %35 = vector.extract_strided_slice %20 {offsets = [0, 2], sizes = [8, 1], strides = [1, 1]} : vector<8x10xf32> to vector<8x1xf32>
    %36 = vector.extract_strided_slice %4 {offsets = [2, 0], sizes = [1, 3], strides = [1, 1]} : vector<10x3xf32> to vector<1x3xf32>
    %37 = vector.broadcast %35 : vector<8x1xf32> to vector<8x3xf32>
    %38 = vector.broadcast %36 : vector<1x3xf32> to vector<8x3xf32>
    %39 = arith.mulf %37, %38 : vector<8x3xf32>
    %40 = arith.addf %34, %39 : vector<8x3xf32>
    %41 = vector.extract_strided_slice %20 {offsets = [0, 3], sizes = [8, 1], strides = [1, 1]} : vector<8x10xf32> to vector<8x1xf32>
    %42 = vector.extract_strided_slice %4 {offsets = [3, 0], sizes = [1, 3], strides = [1, 1]} : vector<10x3xf32> to vector<1x3xf32>
    %43 = vector.broadcast %41 : vector<8x1xf32> to vector<8x3xf32>
    %44 = vector.broadcast %42 : vector<1x3xf32> to vector<8x3xf32>
    %45 = arith.mulf %43, %44 : vector<8x3xf32>
    %46 = arith.addf %40, %45 : vector<8x3xf32>
    %47 = vector.extract_strided_slice %20 {offsets = [0, 4], sizes = [8, 1], strides = [1, 1]} : vector<8x10xf32> to vector<8x1xf32>
    %48 = vector.extract_strided_slice %4 {offsets = [4, 0], sizes = [1, 3], strides = [1, 1]} : vector<10x3xf32> to vector<1x3xf32>
    %49 = vector.broadcast %47 : vector<8x1xf32> to vector<8x3xf32>
    %50 = vector.broadcast %48 : vector<1x3xf32> to vector<8x3xf32>
    %51 = arith.mulf %49, %50 : vector<8x3xf32>
    %52 = arith.addf %46, %51 : vector<8x3xf32>
    %53 = vector.extract_strided_slice %20 {offsets = [0, 5], sizes = [8, 1], strides = [1, 1]} : vector<8x10xf32> to vector<8x1xf32>
    %54 = vector.extract_strided_slice %4 {offsets = [5, 0], sizes = [1, 3], strides = [1, 1]} : vector<10x3xf32> to vector<1x3xf32>
    %55 = vector.broadcast %53 : vector<8x1xf32> to vector<8x3xf32>
    %56 = vector.broadcast %54 : vector<1x3xf32> to vector<8x3xf32>
    %57 = arith.mulf %55, %56 : vector<8x3xf32>
    %58 = arith.addf %52, %57 : vector<8x3xf32>
    %59 = vector.extract_strided_slice %20 {offsets = [0, 6], sizes = [8, 1], strides = [1, 1]} : vector<8x10xf32> to vector<8x1xf32>
    %60 = vector.extract_strided_slice %4 {offsets = [6, 0], sizes = [1, 3], strides = [1, 1]} : vector<10x3xf32> to vector<1x3xf32>
    %61 = vector.broadcast %59 : vector<8x1xf32> to vector<8x3xf32>
    %62 = vector.broadcast %60 : vector<1x3xf32> to vector<8x3xf32>
    %63 = arith.mulf %61, %62 : vector<8x3xf32>
    %64 = arith.addf %58, %63 : vector<8x3xf32>
    %65 = vector.extract_strided_slice %20 {offsets = [0, 7], sizes = [8, 1], strides = [1, 1]} : vector<8x10xf32> to vector<8x1xf32>
    %66 = vector.extract_strided_slice %4 {offsets = [7, 0], sizes = [1, 3], strides = [1, 1]} : vector<10x3xf32> to vector<1x3xf32>
    %67 = vector.broadcast %65 : vector<8x1xf32> to vector<8x3xf32>
    %68 = vector.broadcast %66 : vector<1x3xf32> to vector<8x3xf32>
    %69 = arith.mulf %67, %68 : vector<8x3xf32>
    %70 = arith.addf %64, %69 : vector<8x3xf32>
    %71 = vector.extract_strided_slice %20 {offsets = [0, 8], sizes = [8, 1], strides = [1, 1]} : vector<8x10xf32> to vector<8x1xf32>
    %72 = vector.extract_strided_slice %4 {offsets = [8, 0], sizes = [1, 3], strides = [1, 1]} : vector<10x3xf32> to vector<1x3xf32>
    %73 = vector.broadcast %71 : vector<8x1xf32> to vector<8x3xf32>
    %74 = vector.broadcast %72 : vector<1x3xf32> to vector<8x3xf32>
    %75 = arith.mulf %73, %74 : vector<8x3xf32>
    %76 = arith.addf %70, %75 : vector<8x3xf32>
    %77 = vector.extract_strided_slice %20 {offsets = [0, 9], sizes = [8, 1], strides = [1, 1]} : vector<8x10xf32> to vector<8x1xf32>
    %78 = vector.extract_strided_slice %4 {offsets = [9, 0], sizes = [1, 3], strides = [1, 1]} : vector<10x3xf32> to vector<1x3xf32>
    %79 = vector.broadcast %77 : vector<8x1xf32> to vector<8x3xf32>
    %80 = vector.broadcast %78 : vector<1x3xf32> to vector<8x3xf32>
    %81 = arith.mulf %79, %80 : vector<8x3xf32>
    %82 = arith.addf %76, %81 : vector<8x3xf32>
    %83 = tpu.iota {dimensions = array<i32: 1>} : vector<8x3xi32>
    %c2_i32 = arith.constant 2 : i32
    %84 = vector.broadcast %c2_i32 : i32 to vector<8x3xi32>
    %85 = arith.cmpi sge, %83, %84 : vector<8x3xi32>
    %cst_3 = arith.constant 0.000000e+00 : f32
    %86 = vector.broadcast %cst_3 : f32 to vector<8x3xf32>
    %87 = arith.select %85, %82, %86 : vector<8x3xi1>, vector<8x3xf32>
    %88 = math.exp %87 : vector<8x3xf32>
    %89 = arith.select %85, %88, %82 : vector<8x3xi1>, vector<8x3xf32>
    %c0_4 = arith.constant 0 : index
    %c0_5 = arith.constant 0 : index
    %90 = vector.load %arg2[%c0_4, %c0_5] : memref<8x3xf32, #tpu.memory_space<vmem>>, vector<8x3xf32>
    tpu.vector_store %arg2[%c0_4, %c0_5], %89 {strides = array<i32>} : memref<8x3xf32, #tpu.memory_space<vmem>>, vector<8x3xf32>,
    return
  }
}

</mosaic_0001>

<llo_original>
// kernel: tpu_custom_call.1
$region0: #{tpu_custom_call.1}
  #allocation0 [shape = 'u32[]', space=smem, size = 0x4, offset = 0x4, fixed_abs, tag = 'smem constant byte address 0x4 - core index']
  #allocation1 [shape = 'u32[72,128]{1,0:T(1,128)}', space=vmem, size = 0x9000, scoped, tag = 'internal scratch']
  %s0 = inlined_call_operand.vmem [shape: f32[8,2], index: 0, kind: input, shape index: {}]
  %s1 = inlined_call_operand.hbm [shape: f32[16,128], index: 1, kind: input, shape index: {}]
  %s2 = inlined_call_operand.vmem [shape: f32[8,3], index: 2, kind: output, shape index: {}]
  %s3 = sld [smem:[#allocation0]]
  $region22: #{tpu_custom_call.1} parent=0
    _
  %s5 = ssub.s32 1, %s3
  %s6 = scalar_select 0, %s5, %s3
  $region1: #{tpu_custom_call.1} parent=0
    #allocation2 [shape = 'u8[8192]{0}', space=vmem, size = 0x2000, scoped, tag = 'input window, operand 1, single buffered']
    #allocation3 [shape = 's32[1]{0}', space=sflag, size = 0x4, scoped, tag = 'scoped memory for tpu_custom_call.1']
    %7 = vsyncpa [#allocation3], 0
    // Predicated region
    $region2: #{tpu_custom_call.1} parent=1 // pred_check
      _
    $region3: #{tpu_custom_call.1} parent=1 // pred_check_branch
      %9 = sbr.rel (0) target = $region5
    $region4: #{tpu_custom_call.1} parent=1 // pred_region
      _
    $region5: #{tpu_custom_call.1} parent=1 // pred_fallthru
      _
    // Predicated region
    $region6: #{tpu_custom_call.1} parent=1 // pred_check
      _
    $region7: #{tpu_custom_call.1} parent=1 // pred_check_branch
      %11 = sbr.rel (0) target = $region9
    $region8: #{tpu_custom_call.1} parent=1 // pred_region
      %13 = vsyncadd [#allocation3], 0
      %s14 = sshll.u32 %s1, 4
      %s15 = int_to_ptr.hbm [resolvable:$true] %s14
      %s16 = sshll.u32 [#allocation2], 4
      %s17 = int_to_ptr.vmem [resolvable:$true] %s16
      %22 = dma.hbm_to_vmem [thread:$0]  %s15, 256, %s17, [#allocation3], 128, 128, 8
    $region9: #{tpu_custom_call.1} parent=1 // pred_fallthru
      _
    // Predicated region
    $region10: #{tpu_custom_call.1} parent=1 // pred_check
      _
    $region11: #{tpu_custom_call.1} parent=1 // pred_check_branch
      %24 = sbr.rel (0) target = $region13
    $region12: #{tpu_custom_call.1} parent=1 // pred_region
      %26 = dma.done [#allocation3], 256
    $region13: #{tpu_custom_call.1} parent=1 // pred_fallthru
      _
    %v27 = vld [vmem:[%s0] sm:$0xff]
    %v28 = vld [vmem:[#allocation2] sm:$0xff]
    %v29 = vld [vmem:[#allocation2 + $0x8] sm:$0xff]
    %31 = vset.pattern.permute.xlu0 0
    %32 = vperm.xlu0 %31, %v27
    %v33 = vpop.permute.xlu0 %32
    %v35 = vperm.slane %v28, 0
    %v36 = vmul.f32 %v33, %v35
    %v37 = vperm.slane %v28, 2
    %v38 = vadd.f32 %v37, %v36
    %39 = vset.pattern.permute.xlu0 1
    %40 = vperm.xlu0 %39, %v27
    %v41 = vpop.permute.xlu0 %40
    %v43 = vperm.slane %v28, 1
    %v44 = vmul.f32 %v41, %v43
    %v45 = vadd.f32 %v38, %v44
    %v46 = vmax.f32 %v45, 0.0
    %v47 = vperm.slane %v29, 5
    %49 = vset.pattern.permute.xlu0 0
    %50 = vperm.xlu0 %49, %v46
    %v51 = vpop.permute.xlu0 %50
    %v53 = vperm.slane %v28, 3
    %v54 = vmul.f32 %v51, %v53
    %v55 = vadd.f32 %v47, %v54
    %56 = vset.pattern.permute.xlu0 1
    %57 = vperm.xlu0 %56, %v46
    %v58 = vpop.permute.xlu0 %57
    %v60 = vperm.slane %v28, 4
    %v61 = vmul.f32 %v58, %v60
    %v62 = vadd.f32 %v55, %v61
    %63 = vset.pattern.permute.xlu0 2
    %64 = vperm.xlu0 %63, %v46
    %v65 = vpop.permute.xlu0 %64
    %v67 = vperm.slane %v28, 5
    %v68 = vmul.f32 %v65, %v67
    %v69 = vadd.f32 %v62, %v68
    %70 = vset.pattern.permute.xlu0 3
    %71 = vperm.xlu0 %70, %v46
    %v72 = vpop.permute.xlu0 %71
    %v74 = vperm.slane %v28, 6
    %v75 = vmul.f32 %v72, %v74
    %v76 = vadd.f32 %v69, %v75
    %77 = vset.pattern.permute.xlu0 4
    %78 = vperm.xlu0 %77, %v46
    %v79 = vpop.permute.xlu0 %78
    %v81 = vperm.slane %v28, 7
    %v82 = vmul.f32 %v79, %v81
    %v83 = vadd.f32 %v76, %v82
    %84 = vset.pattern.permute.xlu0 5
    %85 = vperm.xlu0 %84, %v46
    %v86 = vpop.permute.xlu0 %85
    %v88 = vperm.slane %v29, 0
    %v89 = vmul.f32 %v86, %v88
    %v90 = vadd.f32 %v83, %v89
    %91 = vset.pattern.permute.xlu0 6
    %92 = vperm.xlu0 %91, %v46
    %v93 = vpop.permute.xlu0 %92
    %v95 = vperm.slane %v29, 1
    %v96 = vmul.f32 %v93, %v95
    %v97 = vadd.f32 %v90, %v96
    %98 = vset.pattern.permute.xlu0 7
    %99 = vperm.xlu0 %98, %v46
    %v100 = vpop.permute.xlu0 %99
    %v102 = vperm.slane %v29, 2
    %v103 = vmul.f32 %v100, %v102
    %v104 = vadd.f32 %v97, %v103
    %105 = vset.pattern.permute.xlu0 8
    %106 = vperm.xlu0 %105, %v46
    %v107 = vpop.permute.xlu0 %106
    %v109 = vperm.slane %v29, 3
    %v110 = vmul.f32 %v107, %v109
    %v111 = vadd.f32 %v104, %v110
    %112 = vset.pattern.permute.xlu0 9
    %113 = vperm.xlu0 %112, %v46
    %v114 = vpop.permute.xlu0 %113
    %v116 = vperm.slane %v29, 4
    %v117 = vmul.f32 %v114, %v116
    %v118 = vadd.f32 %v111, %v117
    %v119 = vlaneseq
    %v120 = vand.u32 %v119, 127
    %vm121 = vcmp.ge.s32.totalorder %v120, 2
    %v122 = vsel %vm121, %v118, 0.0
    %v123 = vmul.f32 %v122, 1.442695
    %v124 = vpow.pop %v123
    %v125 = vsel %vm121, %v124, %v118
    %vm126 = vcmask 23552
    %127 = vst.msk [vmem:[%s2] sm:$0xff] %vm126, %v125
    // Predicated region
    $region14: #{tpu_custom_call.1} parent=1 // pred_check
      _
    $region15: #{tpu_custom_call.1} parent=1 // pred_check_branch
      %129 = sbr.rel (0) target = $region17
    $region16: #{tpu_custom_call.1} parent=1 // pred_region
      _
    $region17: #{tpu_custom_call.1} parent=1 // pred_fallthru
      _
    // Predicated region
    $region18: #{tpu_custom_call.1} parent=1 // pred_check
      _
    $region19: #{tpu_custom_call.1} parent=1 // pred_check_branch
      %131 = sbr.rel (0) target = $region21
    $region20: #{tpu_custom_call.1} parent=1 // pred_region
      _
    $region21: #{tpu_custom_call.1} parent=1 // pred_fallthru
      _
    %132 = vsyncpa [#allocation3], 1

</llo_original>
